<compile_context>
chip_gen: v6e
topology: v6e:2x2x1
jax: 0.10.0
libtpu: 0.0.40
codegen_flags: <defaults>
</compile_context>

<pallas_src>
import functools

import jax
import jax.numpy as jnp
from jax.experimental import pallas as pl
from jax.experimental.pallas import tpu as pltpu


def _round_up(x, m):
    return ((x + m - 1) // m) * m


def _dc_ce_kernel(logits_ref, labels_ref,
                  ce_out, tp_out, ps_out, cnt_out,
                  ce_acc, tp_acc, ps_acc, cnt_acc,
                  *, hw_valid, tile_n, need_mask):
    """Per-step: softmax over classes (sublane axis), CE rows, lane-wise
    accumulation of [ce, p*onehot, p, onehot]; epilogue reduces over lanes."""
    j = pl.program_id(1)

    @pl.when(j == 0)
    def _init():
        ce_acc[...] = jnp.zeros_like(ce_acc)
        tp_acc[...] = jnp.zeros_like(tp_acc)
        ps_acc[...] = jnp.zeros_like(ps_acc)
        cnt_acc[...] = jnp.zeros_like(cnt_acc)

    x = logits_ref[0].astype(jnp.float32)           # (C, T)  classes on sublanes
    lbl = labels_ref[0]                             # (1, T)  int32

    # softmax over the class (sublane) axis
    m = jnp.max(x, axis=0, keepdims=True)           # (1, T)
    e = jnp.exp(x - m)                              # (C, T)   (EUP)
    s = jnp.sum(e, axis=0, keepdims=True)           # (1, T)
    p = e * pl.reciprocal(s, approx=False)          # (C, T)

    # one-hot target via class-iota compare (== scatter_ in the reference)
    iota_c = jax.lax.broadcasted_iota(jnp.int32, x.shape, 0)
    onehot = (iota_c == lbl).astype(jnp.float32)    # (C, T)

    # cross entropy per pixel: -log softmax(x)[target] = log(sum exp)+max-x_t
    x_t = jnp.sum(x * onehot, axis=0, keepdims=True)      # (1, T)
    ce_rows = jnp.log(s) + m - x_t                         # (1, T)

    if need_mask:  # static python branch; only traced when padding exists
        lane = jax.lax.broadcasted_iota(jnp.int32, (1, tile_n), 1)
        valid = ((j * tile_n + lane) < hw_valid).astype(jnp.float32)  # (1, T)
        ce_rows = ce_rows * valid
        p = p * valid
        onehot = onehot * valid

    # lane-wise accumulation (pure VPU adds; no per-step cross-lane reductions)
    ce_acc[...] += ce_rows
    tp_acc[...] += p * onehot
    ps_acc[...] += p          # fp = colsum(p)      - tp
    cnt_acc[...] += onehot    # fn = colsum(onehot) - tp

    @pl.when(j == pl.num_programs(1) - 1)
    def _finalize():
        c = tp_acc.shape[0]
        ce_out[0] = jnp.broadcast_to(
            jnp.sum(ce_acc[...], axis=1, keepdims=True), (1, 128))
        tp_out[0] = jnp.broadcast_to(
            jnp.sum(tp_acc[...], axis=1, keepdims=True), (c, 128))
        ps_out[0] = jnp.broadcast_to(
            jnp.sum(ps_acc[...], axis=1, keepdims=True), (c, 128))
        cnt_out[0] = jnp.broadcast_to(
            jnp.sum(cnt_acc[...], axis=1, keepdims=True), (c, 128))


@functools.partial(jax.jit, static_argnames=("max_tile_n",))
def dc_and_ce_loss(net_output, target, max_tile_n=8192,
                   weight_ce=1.0, weight_dice=1.0, smooth=1e-5):
    """net_output: (B, C, H, W) float (f32 or bf16); target: (B, 1, H, W) labels."""
    B, C, H, W = net_output.shape
    hw = H * W
    n_total = B * hw

    # tile selection: lane-dense, as large as reasonable, multiple of 128
    tile_n = _round_up(min(max_tile_n, _round_up(hw, 128)), 128)
    hw_pad = _round_up(hw, tile_n)
    num_j = hw_pad // tile_n

    # channels-first kept; reshapes are free (contiguous), no transpose pass
    logits = net_output.reshape(B, C, hw)
    labels = target.reshape(B, 1, hw).astype(jnp.int32)
    if hw_pad != hw:
        pad = hw_pad - hw
        logits = jnp.pad(logits, ((0, 0), (0, 0), (0, pad)))
        labels = jnp.pad(labels, ((0, 0), (0, 0), (0, pad)))

    kernel = functools.partial(_dc_ce_kernel, hw_valid=hw, tile_n=tile_n,
                               need_mask=(hw_pad != hw))

    # NOTE: VMEM use is ~ (2*C*tile_n*4)*2 + (3C+1)*tile_n*4 bytes; for very
    # large C*tile_n raise pltpu.CompilerParams(vmem_limit_bytes=...) and/or
    # shrink max_tile_n (v7x has 64 MiB physical VMEM vs 128 MiB on v5e/v6e).
    ce_o, tp_o, ps_o, cnt_o = pl.pallas_call(
        kernel,
        out_shape=(
            jax.ShapeDtypeStruct((B, 1, 128), jnp.float32),
            jax.ShapeDtypeStruct((B, C, 128), jnp.float32),
            jax.ShapeDtypeStruct((B, C, 128), jnp.float32),
            jax.ShapeDtypeStruct((B, C, 128), jnp.float32),
        ),
        grid_spec=pltpu.PrefetchScalarGridSpec(
            num_scalar_prefetch=0,
            grid=(B, num_j),
            in_specs=[
                pl.BlockSpec((1, C, tile_n), lambda b, j: (b, 0, j)),
                pl.BlockSpec((1, 1, tile_n), lambda b, j: (b, 0, j)),
            ],
            out_specs=[
                pl.BlockSpec((1, 1, 128), lambda b, j: (b, 0, 0)),
                pl.BlockSpec((1, C, 128), lambda b, j: (b, 0, 0)),
                pl.BlockSpec((1, C, 128), lambda b, j: (b, 0, 0)),
                pl.BlockSpec((1, C, 128), lambda b, j: (b, 0, 0)),
            ],
            scratch_shapes=[
                pltpu.VMEM((1, tile_n), jnp.float32),
                pltpu.VMEM((C, tile_n), jnp.float32),
                pltpu.VMEM((C, tile_n), jnp.float32),
                pltpu.VMEM((C, tile_n), jnp.float32),
            ],
        ),
        compiler_params=pltpu.CompilerParams(
            dimension_semantics=("parallel", "arbitrary")),
    )(logits, labels)

    # ---- tiny per-class finalization in JAX glue (O(C) scalars) ----
    ce_total = jnp.sum(ce_o[:, 0, 0])
    tp = jnp.sum(tp_o[:, :, 0], axis=0)          # (C,)
    psum = jnp.sum(ps_o[:, :, 0], axis=0)        # (C,)
    cnt = jnp.sum(cnt_o[:, :, 0], axis=0)        # (C,)
    fp = psum - tp
    fn = cnt - tp

    nominator = 2.0 * tp + smooth
    denominator = 2.0 * tp + fp + fn + smooth
    dc = nominator / (denominator + 1e-8)
    dc = dc[1:]                                  # do_bg=False, batch_dice=True
    dc_loss = -jnp.mean(dc)

    ce_loss = ce_total / n_total                 # CrossEntropyLoss mean reduction

    # TODO(synk): ignore_label / FLARE24 class-weight / log_dice branches of the
    # module are config-disabled here and not implemented in the kernel.
    return weight_ce * ce_loss + weight_dice * dc_loss


def _reference(net_output, target, smooth=1e-5):
    """Pure-JAX reference of the PyTorch forward (sanity check)."""
    B, C, H, W = net_output.shape
    p = jax.nn.softmax(net_output.astype(jnp.float32), axis=1)
    onehot = jax.nn.one_hot(target[:, 0].astype(jnp.int32), C,
                            axis=1, dtype=jnp.float32)          # (B,C,H,W)
    axes = (0, 2, 3)
    tp = jnp.sum(p * onehot, axis=axes)
    fp = jnp.sum(p * (1 - onehot), axis=axes)
    fn = jnp.sum((1 - p) * onehot, axis=axes)
    dc = (2 * tp + smooth) / (2 * tp + fp + fn + smooth + 1e-8)
    dc_loss = -jnp.mean(dc[1:])
    logp = jax.nn.log_softmax(net_output.astype(jnp.float32), axis=1)
    ce = -jnp.take_along_axis(logp, target.astype(jnp.int32), axis=1)[:, 0]
    ce_loss = jnp.mean(ce)
    return ce_loss + dc_loss


if __name__ == "__main__":
    key = jax.random.PRNGKey(0)
    k1, k2 = jax.random.split(key)
    B, C, H, W = 2, 4, 16, 16
    net_output = jax.random.normal(k1, (B, C, H, W), dtype=jnp.float32)
    target = jax.random.randint(k2, (B, 1, H, W), 0, C).astype(jnp.float32)

    loss = dc_and_ce_loss(net_output, target)
    jax.block_until_ready(loss)

    ref = _reference(net_output, target)
    assert jnp.allclose(loss, ref, rtol=1e-4, atol=1e-5), (loss, ref)
    print("KERNEL_OK")
</pallas_src>

<mosaic_0001>
module attributes {stable_mosaic.version = 11 : i64} {
  func.func @_dc_ce_kernel(%arg0: i32, %arg1: i32, %arg2: memref<1x4x256xf32, #tpu.memory_space<vmem>>, %arg3: memref<1x1x256xi32, #tpu.memory_space<vmem>>, %arg4: memref<1x1x128xf32, #tpu.memory_space<vmem>>, %arg5: memref<1x4x128xf32, #tpu.memory_space<vmem>>, %arg6: memref<1x4x128xf32, #tpu.memory_space<vmem>>, %arg7: memref<1x4x128xf32, #tpu.memory_space<vmem>>, %arg8: memref<1x256xf32, #tpu.memory_space<vmem>>, %arg9: memref<4x256xf32, #tpu.memory_space<vmem>>, %arg10: memref<4x256xf32, #tpu.memory_space<vmem>>, %arg11: memref<4x256xf32, #tpu.memory_space<vmem>>) attributes {dimension_semantics = [#tpu.dimension_semantics<parallel>, #tpu.dimension_semantics<arbitrary>], iteration_bounds = array<i64: 2, 1>, scalar_prefetch = 0 : i64, scratch_operands = 4 : i64, tpu.core_type = #tpu.core_type<tc>, window_params = [{transform_indices = @transform_0, window_bounds = array<i64: 1, 4, 256>}, {transform_indices = @transform_1, window_bounds = array<i64: 1, 1, 256>}, {transform_indices = @transform_2, window_bounds = array<i64: 1, 1, 128>}, {transform_indices = @transform_3, window_bounds = array<i64: 1, 4, 128>}, {transform_indices = @transform_4, window_bounds = array<i64: 1, 4, 128>}, {transform_indices = @transform_5, window_bounds = array<i64: 1, 4, 128>}]} {
    %c0_i32 = arith.constant 0 : i32
    %0 = arith.cmpi eq, %arg1, %c0_i32 : i32
    %1 = arith.extui %0 : i1 to i32
    %c0_i32_0 = arith.constant 0 : i32
    %2 = arith.cmpi ne, %1, %c0_i32_0 : i32
    scf.if %2 {
      %cst_26 = arith.constant 0.000000e+00 : f32
      %44 = vector.broadcast %cst_26 : f32 to vector<1x256xf32>
      %c0_27 = arith.constant 0 : index
      %c0_28 = arith.constant 0 : index
      %45 = vector.load %arg8[%c0_27, %c0_28] : memref<1x256xf32, #tpu.memory_space<vmem>>, vector<1x256xf32>
      tpu.vector_store %arg8[%c0_27, %c0_28], %44 {strides = array<i32>} : memref<1x256xf32, #tpu.memory_space<vmem>>, vector<1x256xf32>,
      %cst_29 = arith.constant 0.000000e+00 : f32
      %46 = vector.broadcast %cst_29 : f32 to vector<4x256xf32>
      %c0_30 = arith.constant 0 : index
      %c0_31 = arith.constant 0 : index
      %47 = vector.load %arg9[%c0_30, %c0_31] : memref<4x256xf32, #tpu.memory_space<vmem>>, vector<4x256xf32>
      tpu.vector_store %arg9[%c0_30, %c0_31], %46 {strides = array<i32>} : memref<4x256xf32, #tpu.memory_space<vmem>>, vector<4x256xf32>,
      %cst_32 = arith.constant 0.000000e+00 : f32
      %48 = vector.broadcast %cst_32 : f32 to vector<4x256xf32>
      %c0_33 = arith.constant 0 : index
      %c0_34 = arith.constant 0 : index
      %49 = vector.load %arg10[%c0_33, %c0_34] : memref<4x256xf32, #tpu.memory_space<vmem>>, vector<4x256xf32>
      tpu.vector_store %arg10[%c0_33, %c0_34], %48 {strides = array<i32>} : memref<4x256xf32, #tpu.memory_space<vmem>>, vector<4x256xf32>,
      %cst_35 = arith.constant 0.000000e+00 : f32
      %50 = vector.broadcast %cst_35 : f32 to vector<4x256xf32>
      %c0_36 = arith.constant 0 : index
      %c0_37 = arith.constant 0 : index
      %51 = vector.load %arg11[%c0_36, %c0_37] : memref<4x256xf32, #tpu.memory_space<vmem>>, vector<4x256xf32>
      tpu.vector_store %arg11[%c0_36, %c0_37], %50 {strides = array<i32>} : memref<4x256xf32, #tpu.memory_space<vmem>>, vector<4x256xf32>,
    } else {
    }
    %c0 = arith.constant 0 : index
    %c0_1 = arith.constant 0 : index
    %c0_2 = arith.constant 0 : index
    %3 = vector.load %arg2[%c0, %c0_1, %c0_2] : memref<1x4x256xf32, #tpu.memory_space<vmem>>, vector<1x4x256xf32>
    %4 = vector.shape_cast %3 : vector<1x4x256xf32> to vector<4x256xf32>
    %c0_3 = arith.constant 0 : index
    %c0_4 = arith.constant 0 : index
    %c0_5 = arith.constant 0 : index
    %5 = vector.load %arg3[%c0_3, %c0_4, %c0_5] : memref<1x1x256xi32, #tpu.memory_space<vmem>>, vector<1x1x256xi32>
    %6 = vector.shape_cast %5 : vector<1x1x256xi32> to vector<1x256xi32>
    %cst = arith.constant dense<0xFF800000> : vector<256xf32>
    %7 = vector.multi_reduction <maximumf>, %4, %cst [0] : vector<4x256xf32> to vector<256xf32>
    %8 = vector.shape_cast %7 : vector<256xf32> to vector<1x256xf32>
    %9 = vector.broadcast %8 : vector<1x256xf32> to vector<4x256xf32>
    %10 = arith.subf %4, %9 : vector<4x256xf32>
    %11 = math.exp %10 : vector<4x256xf32>
    %cst_6 = arith.constant dense<0.000000e+00> : vector<256xf32>
    %12 = vector.multi_reduction <add>, %11, %cst_6 [0] : vector<4x256xf32> to vector<256xf32>
    %13 = vector.shape_cast %12 : vector<256xf32> to vector<1x256xf32>
    %14 = tpu.reciprocal %13 : vector<1x256xf32> -> vector<1x256xf32>
    %15 = vector.broadcast %14 : vector<1x256xf32> to vector<4x256xf32>
    %16 = arith.mulf %11, %15 : vector<4x256xf32>
    %17 = tpu.iota {dimensions = array<i32: 0>} : vector<4x256xi32>
    %18 = vector.broadcast %6 : vector<1x256xi32> to vector<4x256xi32>
    %19 = arith.cmpi eq, %17, %18 : vector<4x256xi32>
    %20 = arith.extui %19 : vector<4x256xi1> to vector<4x256xi32>
    %21 = arith.sitofp %20 : vector<4x256xi32> to vector<4x256xf32>
    %22 = arith.mulf %4, %21 : vector<4x256xf32>
    %cst_7 = arith.constant dense<0.000000e+00> : vector<256xf32>
    %23 = vector.multi_reduction <add>, %22, %cst_7 [0] : vector<4x256xf32> to vector<256xf32>
    %24 = vector.shape_cast %23 : vector<256xf32> to vector<1x256xf32>
    %25 = math.log %13 : vector<1x256xf32>
    %26 = arith.addf %25, %8 : vector<1x256xf32>
    %27 = arith.subf %26, %24 : vector<1x256xf32>
    %c0_8 = arith.constant 0 : index
    %c0_9 = arith.constant 0 : index
    %28 = vector.load %arg8[%c0_8, %c0_9] : memref<1x256xf32, #tpu.memory_space<vmem>>, vector<1x256xf32>
    %29 = arith.addf %28, %27 : vector<1x256xf32>
    %c0_10 = arith.constant 0 : index
    %c0_11 = arith.constant 0 : index
    %30 = vector.load %arg8[%c0_10, %c0_11] : memref<1x256xf32, #tpu.memory_space<vmem>>, vector<1x256xf32>
    tpu.vector_store %arg8[%c0_10, %c0_11], %29 {strides = array<i32>} : memref<1x256xf32, #tpu.memory_space<vmem>>, vector<1x256xf32>,
    %c0_12 = arith.constant 0 : index
    %c0_13 = arith.constant 0 : index
    %31 = vector.load %arg9[%c0_12, %c0_13] : memref<4x256xf32, #tpu.memory_space<vmem>>, vector<4x256xf32>
    %32 = arith.mulf %16, %21 : vector<4x256xf32>
    %33 = arith.addf %31, %32 : vector<4x256xf32>
    %c0_14 = arith.constant 0 : index
    %c0_15 = arith.constant 0 : index
    %34 = vector.load %arg9[%c0_14, %c0_15] : memref<4x256xf32, #tpu.memory_space<vmem>>, vector<4x256xf32>
    tpu.vector_store %arg9[%c0_14, %c0_15], %33 {strides = array<i32>} : memref<4x256xf32, #tpu.memory_space<vmem>>, vector<4x256xf32>,
    %c0_16 = arith.constant 0 : index
    %c0_17 = arith.constant 0 : index
    %35 = vector.load %arg10[%c0_16, %c0_17] : memref<4x256xf32, #tpu.memory_space<vmem>>, vector<4x256xf32>
    %36 = arith.addf %35, %16 : vector<4x256xf32>
    %c0_18 = arith.constant 0 : index
    %c0_19 = arith.constant 0 : index
    %37 = vector.load %arg10[%c0_18, %c0_19] : memref<4x256xf32, #tpu.memory_space<vmem>>, vector<4x256xf32>
    tpu.vector_store %arg10[%c0_18, %c0_19], %36 {strides = array<i32>} : memref<4x256xf32, #tpu.memory_space<vmem>>, vector<4x256xf32>,
    %c0_20 = arith.constant 0 : index
    %c0_21 = arith.constant 0 : index
    %38 = vector.load %arg11[%c0_20, %c0_21] : memref<4x256xf32, #tpu.memory_space<vmem>>, vector<4x256xf32>
    %39 = arith.addf %38, %21 : vector<4x256xf32>
    %c0_22 = arith.constant 0 : index
    %c0_23 = arith.constant 0 : index
    %40 = vector.load %arg11[%c0_22, %c0_23] : memref<4x256xf32, #tpu.memory_space<vmem>>, vector<4x256xf32>
    tpu.vector_store %arg11[%c0_22, %c0_23], %39 {strides = array<i32>} : memref<4x256xf32, #tpu.memory_space<vmem>>, vector<4x256xf32>,
    %c0_i32_24 = arith.constant 0 : i32
    %41 = arith.cmpi eq, %arg1, %c0_i32_24 : i32
    %42 = arith.extui %41 : i1 to i32
    %c0_i32_25 = arith.constant 0 : i32
    %43 = arith.cmpi ne, %42, %c0_i32_25 : i32
    scf.if %43 {
      %c0_26 = arith.constant 0 : index
      %c0_27 = arith.constant 0 : index
      %44 = vector.load %arg8[%c0_26, %c0_27] : memref<1x256xf32, #tpu.memory_space<vmem>>, vector<1x256xf32>
      %cst_28 = arith.constant dense<0.000000e+00> : vector<1xf32>
      %45 = vector.multi_reduction <add>, %44, %cst_28 [1] : vector<1x256xf32> to vector<1xf32>
      %46 = vector.shape_cast %45 : vector<1xf32> to vector<1x1xf32>
      %47 = vector.shape_cast %46 : vector<1x1xf32> to vector<1x1xf32>
      %48 = vector.broadcast %47 : vector<1x1xf32> to vector<1x128xf32>
      %c0_29 = arith.constant 0 : index
      %c0_30 = arith.constant 0 : index
      %c0_31 = arith.constant 0 : index
      %49 = vector.load %arg4[%c0_29, %c0_30, %c0_31] : memref<1x1x128xf32, #tpu.memory_space<vmem>>, vector<1x1x128xf32>
      %50 = vector.shape_cast %49 : vector<1x1x128xf32> to vector<1x128xf32>
      %51 = vector.shape_cast %48 : vector<1x128xf32> to vector<1x1x128xf32>
      tpu.vector_store %arg4[%c0_29, %c0_30, %c0_31], %51 {strides = array<i32>} : memref<1x1x128xf32, #tpu.memory_space<vmem>>, vector<1x1x128xf32>,
      %c0_32 = arith.constant 0 : index
      %c0_33 = arith.constant 0 : index
      %52 = vector.load %arg9[%c0_32, %c0_33] : memref<4x256xf32, #tpu.memory_space<vmem>>, vector<4x256xf32>
      %cst_34 = arith.constant dense<0.000000e+00> : vector<4xf32>
      %53 = vector.multi_reduction <add>, %52, %cst_34 [1] : vector<4x256xf32> to vector<4xf32>
      %54 = vector.shape_cast %53 : vector<4xf32> to vector<4x1xf32>
      %55 = vector.shape_cast %54 : vector<4x1xf32> to vector<4x1xf32>
      %56 = vector.broadcast %55 : vector<4x1xf32> to vector<4x128xf32>
      %c0_35 = arith.constant 0 : index
      %c0_36 = arith.constant 0 : index
      %c0_37 = arith.constant 0 : index
      %57 = vector.load %arg5[%c0_35, %c0_36, %c0_37] : memref<1x4x128xf32, #tpu.memory_space<vmem>>, vector<1x4x128xf32>
      %58 = vector.shape_cast %57 : vector<1x4x128xf32> to vector<4x128xf32>
      %59 = vector.shape_cast %56 : vector<4x128xf32> to vector<1x4x128xf32>
      tpu.vector_store %arg5[%c0_35, %c0_36, %c0_37], %59 {strides = array<i32>} : memref<1x4x128xf32, #tpu.memory_space<vmem>>, vector<1x4x128xf32>,
      %c0_38 = arith.constant 0 : index
      %c0_39 = arith.constant 0 : index
      %60 = vector.load %arg10[%c0_38, %c0_39] : memref<4x256xf32, #tpu.memory_space<vmem>>, vector<4x256xf32>
      %cst_40 = arith.constant dense<0.000000e+00> : vector<4xf32>
      %61 = vector.multi_reduction <add>, %60, %cst_40 [1] : vector<4x256xf32> to vector<4xf32>
      %62 = vector.shape_cast %61 : vector<4xf32> to vector<4x1xf32>
      %63 = vector.shape_cast %62 : vector<4x1xf32> to vector<4x1xf32>
      %64 = vector.broadcast %63 : vector<4x1xf32> to vector<4x128xf32>
      %c0_41 = arith.constant 0 : index
      %c0_42 = arith.constant 0 : index
      %c0_43 = arith.constant 0 : index
      %65 = vector.load %arg6[%c0_41, %c0_42, %c0_43] : memref<1x4x128xf32, #tpu.memory_space<vmem>>, vector<1x4x128xf32>
      %66 = vector.shape_cast %65 : vector<1x4x128xf32> to vector<4x128xf32>
      %67 = vector.shape_cast %64 : vector<4x128xf32> to vector<1x4x128xf32>
      tpu.vector_store %arg6[%c0_41, %c0_42, %c0_43], %67 {strides = array<i32>} : memref<1x4x128xf32, #tpu.memory_space<vmem>>, vector<1x4x128xf32>,
      %c0_44 = arith.constant 0 : index
      %c0_45 = arith.constant 0 : index
      %68 = vector.load %arg11[%c0_44, %c0_45] : memref<4x256xf32, #tpu.memory_space<vmem>>, vector<4x256xf32>
      %cst_46 = arith.constant dense<0.000000e+00> : vector<4xf32>
      %69 = vector.multi_reduction <add>, %68, %cst_46 [1] : vector<4x256xf32> to vector<4xf32>
      %70 = vector.shape_cast %69 : vector<4xf32> to vector<4x1xf32>
      %71 = vector.shape_cast %70 : vector<4x1xf32> to vector<4x1xf32>
      %72 = vector.broadcast %71 : vector<4x1xf32> to vector<4x128xf32>
      %c0_47 = arith.constant 0 : index
      %c0_48 = arith.constant 0 : index
      %c0_49 = arith.constant 0 : index
      %73 = vector.load %arg7[%c0_47, %c0_48, %c0_49] : memref<1x4x128xf32, #tpu.memory_space<vmem>>, vector<1x4x128xf32>
      %74 = vector.shape_cast %73 : vector<1x4x128xf32> to vector<4x128xf32>
      %75 = vector.shape_cast %72 : vector<4x128xf32> to vector<1x4x128xf32>
      tpu.vector_store %arg7[%c0_47, %c0_48, %c0_49], %75 {strides = array<i32>} : memref<1x4x128xf32, #tpu.memory_space<vmem>>, vector<1x4x128xf32>,
    } else {
    }
    return
  }
  func.func @transform_0(%arg0: i32, %arg1: i32) -> (i32, i32, i32) {
    %c0_i32 = arith.constant 0 : i32
    %c0_i32_0 = arith.constant 0 : i32
    return %arg0, %c0_i32, %arg1 : i32, i32, i32
  }
  func.func @transform_1(%arg0: i32, %arg1: i32) -> (i32, i32, i32) {
    %c0_i32 = arith.constant 0 : i32
    %c0_i32_0 = arith.constant 0 : i32
    return %arg0, %c0_i32, %arg1 : i32, i32, i32
  }
  func.func @transform_2(%arg0: i32, %arg1: i32) -> (i32, i32, i32) {
    %c0_i32 = arith.constant 0 : i32
    %c0_i32_0 = arith.constant 0 : i32
    %c0_i32_1 = arith.constant 0 : i32
    return %arg0, %c0_i32, %c0_i32_0 : i32, i32, i32
  }
  func.func @transform_3(%arg0: i32, %arg1: i32) -> (i32, i32, i32) {
    %c0_i32 = arith.constant 0 : i32
    %c0_i32_0 = arith.constant 0 : i32
    %c0_i32_1 = arith.constant 0 : i32
    return %arg0, %c0_i32, %c0_i32_0 : i32, i32, i32
  }
  func.func @transform_4(%arg0: i32, %arg1: i32) -> (i32, i32, i32) {
    %c0_i32 = arith.constant 0 : i32
    %c0_i32_0 = arith.constant 0 : i32
    %c0_i32_1 = arith.constant 0 : i32
    return %arg0, %c0_i32, %c0_i32_0 : i32, i32, i32
  }
  func.func @transform_5(%arg0: i32, %arg1: i32) -> (i32, i32, i32) {
    %c0_i32 = arith.constant 0 : i32
    %c0_i32_0 = arith.constant 0 : i32
    %c0_i32_1 = arith.constant 0 : i32
    return %arg0, %c0_i32, %c0_i32_0 : i32, i32, i32
  }
}

</mosaic_0001>

<llo_original>
// kernel: dc_and_ce_loss.1
$region0: #{dc_and_ce_loss.1}
  #allocation0 [shape = 'u32[]', space=smem, size = 0x4, offset = 0x4, fixed_abs, tag = 'smem constant byte address 0x4 - core index']
  #allocation1 [shape = 'u32[144,128]{1,0:T(1,128)}', space=vmem, size = 0x12000, scoped, tag = 'internal scratch']
  #allocation2 [shape = 'f32[1,256]{1,0:T(1,128)}', space=vmem, size = 0x400, scoped, tag = 'scratch operand']
  #allocation3 [shape = 'f32[4,256]{1,0:T(4,128)}', space=vmem, size = 0x1000, scoped, tag = 'scratch operand']
  #allocation4 [shape = 'f32[4,256]{1,0:T(4,128)}', space=vmem, size = 0x1000, scoped, tag = 'scratch operand']
  #allocation5 [shape = 'f32[4,256]{1,0:T(4,128)}', space=vmem, size = 0x1000, scoped, tag = 'scratch operand']
  %s0 = inlined_call_operand.vmem [shape: f32[2,4,256], index: 0, kind: input, shape index: {}]
  %s1 = inlined_call_operand.vmem [shape: s32[2,1,256], index: 1, kind: input, shape index: {}]
  %s2 = inlined_call_operand.vmem [shape: f32[2,1,128], index: 2, kind: output, shape index: {0}]
  %s3 = inlined_call_operand.vmem [shape: f32[2,4,128], index: 3, kind: output, shape index: {1}]
  %s4 = inlined_call_operand.vmem [shape: f32[2,4,128], index: 4, kind: output, shape index: {2}]
  %s5 = inlined_call_operand.vmem [shape: f32[2,4,128], index: 5, kind: output, shape index: {3}]
  %6 = xla_tuple %s2, %s3, %s4, %s5
  %s7 = sld [smem:[#allocation0]]
  $region73: #{dc_and_ce_loss.1} parent=0
    _
  %s9 = ssub.s32 1, %s7
  %s10 = scalar_select 0, %s9, %s7
  loop: start=0, step=1, limit=4
  $region2: #{dc_and_ce_loss.1} parent=0 // loop_pre_header
    _
  $region3: #{dc_and_ce_loss.1} parent=0 // loop_header
    %s12 = sphi 0, %s16
    %p13 = scmp.ge.s32.totalorder %s12, 4
    %s19 = sphi 0, %s31
    %s20 = sphi 0, %s27
    %s21 = sphi 0, %s19
    %s22 = sphi 0, %s20
    %s23 = sphi 0, %s21
    %s24 = sphi 0, %s22
    %s36 = sphi 0, %s38
    %s39 = sphi 0, %s36
    %s40 = sphi 0, %s39
    %s56 = sphi 0, %s40
    %s64 = sphi 0, %s66
    %s67 = sphi 0, %s64
    %s68 = sphi 0, %s67
    %s84 = sphi 0, %s68
    %s90 = sphi 0, %s92
    %s93 = sphi 0, %s90
    %s94 = sphi 0, %s93
    %s110 = sphi 0, %s94
    %s116 = sphi 0, %s118
    %s119 = sphi 0, %s116
    %s120 = sphi 0, %s119
    %s136 = sphi 0, %s120
    %s142 = sphi 0, %s144
    %s145 = sphi 0, %s142
    %s146 = sphi 0, %s145
    %s162 = sphi 0, %s146
    %s168 = sphi 0, %s170
    %s171 = sphi 0, %s168
    %s172 = sphi 0, %s171
    %s188 = sphi 0, %s172
  $region4: #{dc_and_ce_loss.1} parent=0 // loop_header_branch
    %15 = sbr.rel (%p13) target = $region8
  $region5: #{dc_and_ce_loss.1} parent=0 // loop_body
    %s17 = ssub.s32 %s12, 1
    %s18 = ssub.s32 %s12, 2
    %s25 = sadd.s32 1, %s20
    %p26 = scmp.ge.s32.totalorder %s25, 1
    %s27 = scalar_select %p26, 0, %s25
    %s28 = sadd.s32 1, %s19
    %s29 = scalar_select %p26, %s28, %s19
    %p30 = scmp.ge.s32.totalorder %s29, 2
    %s31 = scalar_select %p30, 0, %s29
    %s32 = ssub.s32 %s19, %s31
    %s33 = ssub.s32 %s20, %s27
    %s34 = sor.u32 %s32, %s33
    %p35 = scmp.eq.s32.totalorder %s34, 0
    %s37 = sadd.s32 %s36, 1
    %s38 = scalar_select %p35, %s36, %s37
    %p41 = pneg %p35
    %p42 = scmp.eq.s32.totalorder %s12, 1
    %p43 = por %p41, %p42
    %p44 = scmp.ne.s32.totalorder %s36, %s39
    %p45 = scmp.eq.s32.totalorder %s12, 0
    %p46 = por %p44, %p45
    %p47 = scmp.ne.s32.totalorder %s36, %s39
    %p48 = scmp.eq.s32.totalorder %s17, 1
    %p49 = por %p47, %p48
    %p50 = scmp.ne.s32.totalorder %s39, %s40
    %p51 = scmp.eq.s32.totalorder %s17, 0
    %p52 = por %p50, %p51
    %p53 = scmp.ne.s32.totalorder %s39, %s40
    %p54 = scmp.eq.s32.totalorder %s18, 1
    %p55 = por %p53, %p54
    %p57 = scmp.ne.s32.totalorder %s40, %s56
    %p58 = scmp.eq.s32.totalorder %s18, 0
    %p59 = por %p57, %p58
    %s60 = ssub.s32 %s19, %s31
    %s61 = ssub.s32 %s20, %s27
    %s62 = sor.u32 %s60, %s61
    %p63 = scmp.eq.s32.totalorder %s62, 0
    %s65 = sadd.s32 %s64, 1
    %s66 = scalar_select %p63, %s64, %s65
    %p69 = pneg %p63
    %p70 = scmp.eq.s32.totalorder %s12, 1
    %p71 = por %p69, %p70
    %p72 = scmp.ne.s32.totalorder %s64, %s67
    %p73 = scmp.eq.s32.totalorder %s12, 0
    %p74 = por %p72, %p73
    %p75 = scmp.ne.s32.totalorder %s64, %s67
    %p76 = scmp.eq.s32.totalorder %s17, 1
    %p77 = por %p75, %p76
    %p78 = scmp.ne.s32.totalorder %s67, %s68
    %p79 = scmp.eq.s32.totalorder %s17, 0
    %p80 = por %p78, %p79
    %p81 = scmp.ne.s32.totalorder %s67, %s68
    %p82 = scmp.eq.s32.totalorder %s18, 1
    %p83 = por %p81, %p82
    %p85 = scmp.ne.s32.totalorder %s68, %s84
    %p86 = scmp.eq.s32.totalorder %s18, 0
    %p87 = por %p85, %p86
    %s88 = ssub.s32 %s19, %s31
    %p89 = scmp.eq.s32.totalorder %s88, 0
    %s91 = sadd.s32 %s90, 1
    %s92 = scalar_select %p89, %s90, %s91
    %p95 = pneg %p89
    %p96 = scmp.eq.s32.totalorder %s12, 1
    %p97 = por %p95, %p96
    %p98 = scmp.ne.s32.totalorder %s90, %s93
    %p99 = scmp.eq.s32.totalorder %s12, 0
    %p100 = por %p98, %p99
    %p101 = scmp.ne.s32.totalorder %s90, %s93
    %p102 = scmp.eq.s32.totalorder %s17, 1
    %p103 = por %p101, %p102
    %p104 = scmp.ne.s32.totalorder %s93, %s94
    %p105 = scmp.eq.s32.totalorder %s17, 0
    %p106 = por %p104, %p105
    %p107 = scmp.ne.s32.totalorder %s93, %s94
    %p108 = scmp.eq.s32.totalorder %s18, 1
    %p109 = por %p107, %p108
    %p111 = scmp.ne.s32.totalorder %s94, %s110
    %p112 = scmp.eq.s32.totalorder %s18, 0
    %p113 = por %p111, %p112
    %s114 = ssub.s32 %s19, %s31
    %p115 = scmp.eq.s32.totalorder %s114, 0
    %s117 = sadd.s32 %s116, 1
    %s118 = scalar_select %p115, %s116, %s117
    %p121 = pneg %p115
    %p122 = scmp.eq.s32.totalorder %s12, 1
    %p123 = por %p121, %p122
    %p124 = scmp.ne.s32.totalorder %s116, %s119
    %p125 = scmp.eq.s32.totalorder %s12, 0
    %p126 = por %p124, %p125
    %p127 = scmp.ne.s32.totalorder %s116, %s119
    %p128 = scmp.eq.s32.totalorder %s17, 1
    %p129 = por %p127, %p128
    %p130 = scmp.ne.s32.totalorder %s119, %s120
    %p131 = scmp.eq.s32.totalorder %s17, 0
    %p132 = por %p130, %p131
    %p133 = scmp.ne.s32.totalorder %s119, %s120
    %p134 = scmp.eq.s32.totalorder %s18, 1
    %p135 = por %p133, %p134
    %p137 = scmp.ne.s32.totalorder %s120, %s136
    %p138 = scmp.eq.s32.totalorder %s18, 0
    %p139 = por %p137, %p138
    %s140 = ssub.s32 %s19, %s31
    %p141 = scmp.eq.s32.totalorder %s140, 0
    %s143 = sadd.s32 %s142, 1
    %s144 = scalar_select %p141, %s142, %s143
    %p147 = pneg %p141
    %p148 = scmp.eq.s32.totalorder %s12, 1
    %p149 = por %p147, %p148
    %p150 = scmp.ne.s32.totalorder %s142, %s145
    %p151 = scmp.eq.s32.totalorder %s12, 0
    %p152 = por %p150, %p151
    %p153 = scmp.ne.s32.totalorder %s142, %s145
    %p154 = scmp.eq.s32.totalorder %s17, 1
    %p155 = por %p153, %p154
    %p156 = scmp.ne.s32.totalorder %s145, %s146
    %p157 = scmp.eq.s32.totalorder %s17, 0
    %p158 = por %p156, %p157
    %p159 = scmp.ne.s32.totalorder %s145, %s146
    %p160 = scmp.eq.s32.totalorder %s18, 1
    %p161 = por %p159, %p160
    %p163 = scmp.ne.s32.totalorder %s146, %s162
    %p164 = scmp.eq.s32.totalorder %s18, 0
    %p165 = por %p163, %p164
    %s166 = ssub.s32 %s19, %s31
    %p167 = scmp.eq.s32.totalorder %s166, 0
    %s169 = sadd.s32 %s168, 1
    %s170 = scalar_select %p167, %s168, %s169
    %p173 = pneg %p167
    %p174 = scmp.eq.s32.totalorder %s12, 1
    %p175 = por %p173, %p174
    %p176 = scmp.ne.s32.totalorder %s168, %s171
    %p177 = scmp.eq.s32.totalorder %s12, 0
    %p178 = por %p176, %p177
    %p179 = scmp.ne.s32.totalorder %s168, %s171
    %p180 = scmp.eq.s32.totalorder %s17, 1
    %p181 = por %p179, %p180
    %p182 = scmp.ne.s32.totalorder %s171, %s172
    %p183 = scmp.eq.s32.totalorder %s17, 0
    %p184 = por %p182, %p183
    %p185 = scmp.ne.s32.totalorder %s171, %s172
    %p186 = scmp.eq.s32.totalorder %s18, 1
    %p187 = por %p185, %p186
    %p189 = scmp.ne.s32.totalorder %s172, %s188
    %p190 = scmp.eq.s32.totalorder %s18, 0
    %p191 = por %p189, %p190
    %p192 = scmp.le.s32.totalorder 1, %s12
    %p193 = scmp.lt.s32.totalorder %s12, 3
    %p194 = pnand %p192, %p193
    %p195 = pneg %p194
    // Predicated region
    $region9: #{dc_and_ce_loss.1} parent=5 // pred_check
      _
    $region10: #{dc_and_ce_loss.1} parent=5 // pred_check_branch
      %197 = sbr.rel (%p194) target = $region12
    $region11: #{dc_and_ce_loss.1} parent=5 // pred_region
      %s198 = ssub.s32 %s12, 1
    $region12: #{dc_and_ce_loss.1} parent=5 // pred_fallthru
      _
    %p199 = scmp.lt.s32.totalorder %s12, 2
    // Predicated region
    $region13: #{dc_and_ce_loss.1} parent=5 // pred_check
      %p200 = pneg %p199
    $region14: #{dc_and_ce_loss.1} parent=5 // pred_check_branch
      %202 = sbr.rel (%p200) target = $region16
    $region15: #{dc_and_ce_loss.1} parent=5 // pred_region
      // Predicated region
      $region17: #{dc_and_ce_loss.1} parent=15 // pred_check
        %p203 = pneg %p46
      $region18: #{dc_and_ce_loss.1} parent=15 // pred_check_branch
        %205 = sbr.rel (%p203) target = $region20
      $region19: #{dc_and_ce_loss.1} parent=15 // pred_region
        %s206 = smul.u32 2, %s20
        %p207 = scmp.lt.s32.totalorder %s19, 1
        %s208 = scalar_select %p207, %s19, 1
        %p209 = scmp.lt.s32.totalorder %s206, 1
        %s210 = scalar_select %p209, %s206, 1
        %s211 = smul.addr %s208, 2
        %s212 = sadd.s32 %s210, %s211
        %s213 = smul.addr %s212, 4
        %s214 = scalar_lea.vmem %s0, %s213
        %s215 = smul.u32 2, %s20
      $region20: #{dc_and_ce_loss.1} parent=15 // pred_fallthru
        _
      // Predicated region
      $region21: #{dc_and_ce_loss.1} parent=15 // pred_check
        %p216 = pneg %p74
      $region22: #{dc_and_ce_loss.1} parent=15 // pred_check_branch
        %218 = sbr.rel (%p216) target = $region24
      $region23: #{dc_and_ce_loss.1} parent=15 // pred_region
        %s219 = smul.u32 2, %s20
        %p220 = scmp.lt.s32.totalorder %s19, 1
        %s221 = scalar_select %p220, %s19, 1
        %p222 = scmp.lt.s32.totalorder %s219, 1
        %s223 = scalar_select %p222, %s219, 1
        %s224 = smul.addr %s221, 2
        %s225 = sadd.s32 %s223, %s224
        %s226 = scalar_lea.vmem %s1, %s225
        %s227 = smul.u32 2, %s20
      $region24: #{dc_and_ce_loss.1} parent=15 // pred_fallthru
        _
    $region16: #{dc_and_ce_loss.1} parent=5 // pred_fallthru
      _
    %p228 = scmp.le.s32.totalorder 1, %s12
    %p229 = scmp.lt.s32.totalorder %s12, 3
    %p230 = pnand %p228, %p229
    %p231 = pneg %p230
    // Predicated region
    $region25: #{dc_and_ce_loss.1} parent=5 // pred_check
      _
    $region26: #{dc_and_ce_loss.1} parent=5 // pred_check_branch
      %233 = sbr.rel (%p230) target = $region28
    $region27: #{dc_and_ce_loss.1} parent=5 // pred_region
      %s234 = ssub.s32 %s12, 1
      %s235 = smul.u32 2, %s22
      %p236 = scmp.lt.s32.totalorder %s21, 1
      %s237 = scalar_select %p236, %s21, 1
      %p238 = scmp.lt.s32.totalorder %s235, 1
      %s239 = scalar_select %p238, %s235, 1
      %s240 = smul.addr %s237, 2
      %s241 = sadd.s32 %s239, %s240
      %s242 = smul.addr %s241, 4
      %s243 = scalar_lea.vmem %s0, %s242
      %p244 = pneg %p52
      %p245 = pneg %p49
      %s246 = smul.u32 2, %s22
      %p247 = scmp.lt.s32.totalorder %s21, 1
      %s248 = scalar_select %p247, %s21, 1
      %p249 = scmp.lt.s32.totalorder %s246, 1
      %s250 = scalar_select %p249, %s246, 1
      %s251 = smul.addr %s248, 2
      %s252 = sadd.s32 %s250, %s251
      %s253 = scalar_lea.vmem %s1, %s252
      %p254 = pneg %p80
      %p255 = pneg %p77
      %p256 = pneg %p106
      %p257 = pneg %p103
      %p258 = scmp.lt.s32.totalorder %s21, 1
      %s259 = scalar_select %p258, %s21, 1
      %s260 = scalar_lea.vmem %s2, %s259
      %p261 = pneg %p132
      %p262 = pneg %p129
      %p263 = scmp.lt.s32.totalorder %s21, 1
      %s264 = scalar_select %p263, %s21, 1
      %s265 = smul.addr %s264, 4
      %s266 = scalar_lea.vmem %s3, %s265
      %p267 = pneg %p158
      %p268 = pneg %p155
      %p269 = scmp.lt.s32.totalorder %s21, 1
      %s270 = scalar_select %p269, %s21, 1
      %s271 = smul.addr %s270, 4
      %s272 = scalar_lea.vmem %s4, %s271
      %p273 = pneg %p184
      %p274 = pneg %p181
      %p275 = scmp.lt.s32.totalorder %s21, 1
      %s276 = scalar_select %p275, %s21, 1
      %s277 = smul.addr %s276, 4
      %s278 = scalar_lea.vmem %s5, %s277
      %s279 = smul.u32 2, %s22
      %p280 = scmp.lt.s32.totalorder %s21, 1
      %s281 = scalar_select %p280, %s21, 1
      %p282 = scmp.lt.s32.totalorder %s279, 1
      %s283 = scalar_select %p282, %s279, 1
      %s284 = smul.addr %s281, 2
      %s285 = sadd.s32 %s283, %s284
      %s286 = smul.addr %s285, 4
      %s287 = scalar_lea.vmem %s0, %s286
      %s288 = smul.u32 2, %s22
      %s289 = smul.u32 2, %s22
      %p290 = scmp.lt.s32.totalorder %s21, 1
      %s291 = scalar_select %p290, %s21, 1
      %p292 = scmp.lt.s32.totalorder %s289, 1
      %s293 = scalar_select %p292, %s289, 1
      %s294 = smul.addr %s291, 2
      %s295 = sadd.s32 %s293, %s294
      %s296 = scalar_lea.vmem %s1, %s295
      %s297 = smul.u32 2, %s22
      %p298 = scmp.lt.s32.totalorder %s21, 1
      %s299 = scalar_select %p298, %s21, 1
      %s300 = scalar_lea.vmem %s2, %s299
      %p301 = scmp.lt.s32.totalorder %s21, 1
      %s302 = scalar_select %p301, %s21, 1
      %s303 = smul.addr %s302, 4
      %s304 = scalar_lea.vmem %s3, %s303
      %p305 = scmp.lt.s32.totalorder %s21, 1
      %s306 = scalar_select %p305, %s21, 1
      %s307 = smul.addr %s306, 4
      %s308 = scalar_lea.vmem %s4, %s307
      %p309 = scmp.lt.s32.totalorder %s21, 1
      %s310 = scalar_select %p309, %s21, 1
      %s311 = smul.addr %s310, 4
      %s312 = scalar_lea.vmem %s5, %s311
      %p313 = scmp.eq.s32.totalorder %s22, 0
      // Predicated region
      $region29: #{dc_and_ce_loss.1} parent=27 // pred_check
        %p314 = pneg %p313
      $region30: #{dc_and_ce_loss.1} parent=27 // pred_check_branch
        %316 = sbr.rel (%p314) target = $region32
      $region31: #{dc_and_ce_loss.1} parent=27 // pred_region
        %v317 = vlaneseq
        %vm318 = vcmp.ge.s32.totalorder %v317, 0
        %vm319 = vcmp.lt.s32.totalorder %v317, 256
        %vm320 = vmand %vm318, %vm319
        %321 = vst.msk [vmem:[#allocation2] sm:$0x3] %vm320, 0.0
        %322 = vst [vmem:[#allocation3] sm:$0xff] 0.0
        %323 = vst [vmem:[#allocation4] sm:$0xff] 0.0
        %324 = vst [vmem:[#allocation5] sm:$0xff] 0.0
      $region32: #{dc_and_ce_loss.1} parent=27 // pred_fallthru
        _
      %v325 = vld [vmem:[%s287] sm:$0xff]
      %v326 = vld [vmem:[%s296] sm:$0x3]
      %v328 = vcombine.high %v325, %v325
      %vm330 = vcmask 1043456
      %v331 = vsel %vm330, %v325, -inf
      %v332 = vrot.slane %v331, 4
      %v333 = vmax.f32 %v331, %v332
      %v334 = vrot.slane %v333, 2
      %v335 = vmax.f32 %v333, %v334
      %v336 = vrot.slane %v335, 1
      %v337 = vmax.f32 %v335, %v336
      %v338 = vsel %vm330, %v328, -inf
      %v339 = vrot.slane %v338, 4
      %v340 = vmax.f32 %v338, %v339
      %v341 = vrot.slane %v340, 2
      %v342 = vmax.f32 %v340, %v341
      %v343 = vrot.slane %v342, 1
      %v344 = vmax.f32 %v342, %v343
      %v347 = vcombine.low %v337, %v344
      %v349 = vsub.f32 %v325, %v347
      %v350 = vmul.f32 %v349, 1.442695
      %v351 = vpow.pop %v350
      %v353 = vcombine.high %v351, %v351
      %v355 = vsel %vm330, %v351, 0.0
      %v356 = vrot.slane %v355, 4
      %v357 = vadd.f32 %v355, %v356
      %v358 = vrot.slane %v357, 2
      %v359 = vadd.f32 %v357, %v358
      %v360 = vrot.slane %v359, 1
      %v361 = vadd.f32 %v359, %v360
      %v362 = vsel %vm330, %v353, 0.0
      %v363 = vrot.slane %v362, 4
      %v364 = vadd.f32 %v362, %v363
      %v365 = vrot.slane %v364, 2
      %v366 = vadd.f32 %v364, %v365
      %v367 = vrot.slane %v366, 1
      %v368 = vadd.f32 %v366, %v367
      %v369 = vrcp.pop %v361
      %v370 = vrcp.pop %v368
      %v373 = vcombine.low %v369, %v370
      %v375 = vmul.f32 %v351, %v373
      %v376 = vlaneseq
      %v377 = vshrl.u32 %v376, 7
      %v378 = vlaneseq
      %v379 = vshrl.u32 %v378, 7
      %v380 = vsub.s32 0, %v379
      %v381 = vrot.slane %v326, %v380
      %v382 = vlaneseq
      %v383 = vshrl.u32 %v382, 7
      %v384 = vsub.s32 1, %v383
      %v385 = vrot.slane %v326, %v384
      %vm386 = vcmp.eq.s32.totalorder %v377, %v381
      %vm387 = vcmp.eq.s32.totalorder %v377, %v385
      %v388 = vsel %vm386, 1, 0
      %v389 = vsel %vm387, 1, 0
      %v390 = vcvt.s32.f32 %v388
      %v391 = vcvt.s32.f32 %v389
      %v394 = vcombine.low %v390, %v391
      %v396 = vmul.f32 %v325, %v394
      %v398 = vcombine.high %v396, %v396
      %v400 = vsel %vm330, %v396, 0.0
      %v401 = vrot.slane %v400, 4
      %v402 = vadd.f32 %v400, %v401
      %v403 = vrot.slane %v402, 2
      %v404 = vadd.f32 %v402, %v403
      %v405 = vrot.slane %v404, 1
      %v406 = vadd.f32 %v404, %v405
      %v407 = vsel %vm330, %v398, 0.0
      %v408 = vrot.slane %v407, 4
      %v409 = vadd.f32 %v407, %v408
      %v410 = vrot.slane %v409, 2
      %v411 = vadd.f32 %v409, %v410
      %v412 = vrot.slane %v411, 1
      %v413 = vadd.f32 %v411, %v412
      %v414 = vlog2.pop %v361
      %v415 = vmul.f32 %v414, 0.6931472
      %v416 = vlog2.pop %v368
      %v417 = vmul.f32 %v416, 0.6931472
      %v418 = vadd.f32 %v415, %v337
      %v419 = vadd.f32 %v417, %v344
      %v420 = vsub.f32 %v418, %v406
      %v421 = vsub.f32 %v419, %v413
      %v422 = vld [vmem:[#allocation2] sm:$0x3]
      %v425 = vcombine.low %v420, %v421
      %v427 = vunpack.c.l.s4 1966171168
      %v428 = vunpack.c.0.s8 %v427
      %v429 = vlaneseq
      %v430 = vshrl.u32 %v429, 7
      %v431 = vsub.s32 %v428, %v430
      %v432 = vrot.slane %v425, %v431
      %v434 = vunpack.c.l.s4 1966171168
      %v435 = vunpack.c.0.s8 %v434
      %v436 = vlaneseq
      %v437 = vshrl.u32 %v436, 7
      %v438 = vsub.s32 %v435, %v437
      %v439 = vrot.slane %v432, %v438
      %v441 = vadd.f32 %v422, %v439
      %v442 = vlaneseq
      %vm443 = vcmp.ge.s32.totalorder %v442, 0
      %vm444 = vcmp.lt.s32.totalorder %v442, 256
      %vm445 = vmand %vm443, %vm444
      %446 = vst.msk [vmem:[#allocation2] sm:$0x3] %vm445, %v441
      %v447 = vld [vmem:[#allocation3] sm:$0xff]
      %v448 = vmul.f32 %v375, %v394
      %v449 = vadd.f32 %v447, %v448
      %450 = vst [vmem:[#allocation3] sm:$0xff] %v449
      %v451 = vld [vmem:[#allocation4] sm:$0xff]
      %v452 = vadd.f32 %v451, %v375
      %453 = vst [vmem:[#allocation4] sm:$0xff] %v452
      %v454 = vld [vmem:[#allocation5] sm:$0xff]
      %v455 = vadd.f32 %v454, %v394
      %456 = vst [vmem:[#allocation5] sm:$0xff] %v455
      // Predicated region
      $region33: #{dc_and_ce_loss.1} parent=27 // pred_check
        %p457 = pneg %p313
      $region34: #{dc_and_ce_loss.1} parent=27 // pred_check_branch
        %459 = sbr.rel (%p457) target = $region36
      $region35: #{dc_and_ce_loss.1} parent=27 // pred_region
        %v460 = vld [vmem:[#allocation2] sm:$0x3]
        %v462 = vlaneseq
        %v463 = vshrl.u32 %v462, 7
        %v464 = vsub.s32 0, %v463
        %v465 = vrot.slane %v460, %v464
        %v466 = vlaneseq
        %v467 = vshrl.u32 %v466, 7
        %v468 = vsub.s32 1, %v467
        %v469 = vrot.slane %v460, %v468
        %vm472 = vcmask 1040384
        %v473 = vsel %vm472, %v465, 0.0
        %v474 = vsel %vm472, %v469, 0.0
        %v475 = vadd.f32 %v473, %v474
        %476 = vadd.xlane.f32.xlu0 %v475
        %v477 = vpop.xlane.xlu0 %476
        %478 = vst [vmem:[%s300] sm:$0x1] %v477
        %v479 = vld [vmem:[#allocation3] sm:$0xff]
        %v481 = vcombine.high %v479, %v479
        %v483 = vsel %vm330, %v479, 0.0
        %v484 = vsel %vm330, %v481, 0.0
        %v485 = vadd.f32 %v483, %v484
        %486 = vadd.xlane.f32.xlu0 %v485
        %v487 = vpop.xlane.xlu0 %486
        %488 = vst [vmem:[%s304] sm:$0xf] %v487
        %v489 = vld [vmem:[#allocation4] sm:$0xff]
        %v491 = vcombine.high %v489, %v489
        %v493 = vsel %vm330, %v489, 0.0
        %v494 = vsel %vm330, %v491, 0.0
        %v495 = vadd.f32 %v493, %v494
        %496 = vadd.xlane.f32.xlu0 %v495
        %v497 = vpop.xlane.xlu0 %496
        %498 = vst [vmem:[%s308] sm:$0xf] %v497
        %v499 = vld [vmem:[#allocation5] sm:$0xff]
        %v501 = vcombine.high %v499, %v499
        %v503 = vsel %vm330, %v499, 0.0
        %v504 = vsel %vm330, %v501, 0.0
        %v505 = vadd.f32 %v503, %v504
        %506 = vadd.xlane.f32.xlu0 %v505
        %v507 = vpop.xlane.xlu0 %506
        %508 = vst [vmem:[%s312] sm:$0xf] %v507
      $region36: #{dc_and_ce_loss.1} parent=27 // pred_fallthru
        _
      %p509 = scmp.lt.s32.totalorder %s21, 1
      %s510 = scalar_select %p509, %s21, 1
      %s511 = scalar_lea.vmem %s2, %s510
      %p512 = scmp.lt.s32.totalorder %s21, 1
      %s513 = scalar_select %p512, %s21, 1
      %s514 = smul.addr %s513, 4
      %s515 = scalar_lea.vmem %s3, %s514
      %p516 = scmp.lt.s32.totalorder %s21, 1
      %s517 = scalar_select %p516, %s21, 1
      %s518 = smul.addr %s517, 4
      %s519 = scalar_lea.vmem %s4, %s518
      %p520 = scmp.lt.s32.totalorder %s21, 1
      %s521 = scalar_select %p520, %s21, 1
      %s522 = smul.addr %s521, 4
      %s523 = scalar_lea.vmem %s5, %s522
      // Predicated region
      $region37: #{dc_and_ce_loss.1} parent=27 // pred_check
        %p524 = pneg %p103
      $region38: #{dc_and_ce_loss.1} parent=27 // pred_check_branch
        %526 = sbr.rel (%p524) target = $region40
      $region39: #{dc_and_ce_loss.1} parent=27 // pred_region
        _
      $region40: #{dc_and_ce_loss.1} parent=27 // pred_fallthru
        _
      // Predicated region
      $region41: #{dc_and_ce_loss.1} parent=27 // pred_check
        %p527 = pneg %p129
      $region42: #{dc_and_ce_loss.1} parent=27 // pred_check_branch
        %529 = sbr.rel (%p527) target = $region44
      $region43: #{dc_and_ce_loss.1} parent=27 // pred_region
        _
      $region44: #{dc_and_ce_loss.1} parent=27 // pred_fallthru
        _
      // Predicated region
      $region45: #{dc_and_ce_loss.1} parent=27 // pred_check
        %p530 = pneg %p155
      $region46: #{dc_and_ce_loss.1} parent=27 // pred_check_branch
        %532 = sbr.rel (%p530) target = $region48
      $region47: #{dc_and_ce_loss.1} parent=27 // pred_region
        _
      $region48: #{dc_and_ce_loss.1} parent=27 // pred_fallthru
        _
      // Predicated region
      $region49: #{dc_and_ce_loss.1} parent=27 // pred_check
        %p533 = pneg %p181
      $region50: #{dc_and_ce_loss.1} parent=27 // pred_check_branch
        %535 = sbr.rel (%p533) target = $region52
      $region51: #{dc_and_ce_loss.1} parent=27 // pred_region
        _
      $region52: #{dc_and_ce_loss.1} parent=27 // pred_fallthru
        _
    $region28: #{dc_and_ce_loss.1} parent=5 // pred_fallthru
      _
    %p536 = scmp.le.s32.totalorder 2, %s12
    // Predicated region
    $region53: #{dc_and_ce_loss.1} parent=5 // pred_check
      %p537 = pneg %p536
    $region54: #{dc_and_ce_loss.1} parent=5 // pred_check_branch
      %539 = sbr.rel (%p537) target = $region56
    $region55: #{dc_and_ce_loss.1} parent=5 // pred_region
      %s540 = ssub.s32 %s12, 2
      // Predicated region
      $region57: #{dc_and_ce_loss.1} parent=55 // pred_check
        %p541 = pneg %p109
      $region58: #{dc_and_ce_loss.1} parent=55 // pred_check_branch
        %543 = sbr.rel (%p541) target = $region60
      $region59: #{dc_and_ce_loss.1} parent=55 // pred_region
        %p544 = scmp.lt.s32.totalorder %s23, 1
        %s545 = scalar_select %p544, %s23, 1
        %s546 = scalar_lea.vmem %s2, %s545
      $region60: #{dc_and_ce_loss.1} parent=55 // pred_fallthru
        _
      // Predicated region
      $region61: #{dc_and_ce_loss.1} parent=55 // pred_check
        %p547 = pneg %p135
      $region62: #{dc_and_ce_loss.1} parent=55 // pred_check_branch
        %549 = sbr.rel (%p547) target = $region64
      $region63: #{dc_and_ce_loss.1} parent=55 // pred_region
        %p550 = scmp.lt.s32.totalorder %s23, 1
        %s551 = scalar_select %p550, %s23, 1
        %s552 = smul.addr %s551, 4
        %s553 = scalar_lea.vmem %s3, %s552
      $region64: #{dc_and_ce_loss.1} parent=55 // pred_fallthru
        _
      // Predicated region
      $region65: #{dc_and_ce_loss.1} parent=55 // pred_check
        %p554 = pneg %p161
      $region66: #{dc_and_ce_loss.1} parent=55 // pred_check_branch
        %556 = sbr.rel (%p554) target = $region68
      $region67: #{dc_and_ce_loss.1} parent=55 // pred_region
        %p557 = scmp.lt.s32.totalorder %s23, 1
        %s558 = scalar_select %p557, %s23, 1
        %s559 = smul.addr %s558, 4
        %s560 = scalar_lea.vmem %s4, %s559
      $region68: #{dc_and_ce_loss.1} parent=55 // pred_fallthru
        _
      // Predicated region
      $region69: #{dc_and_ce_loss.1} parent=55 // pred_check
        %p561 = pneg %p187
      $region70: #{dc_and_ce_loss.1} parent=55 // pred_check_branch
        %563 = sbr.rel (%p561) target = $region72
      $region71: #{dc_and_ce_loss.1} parent=55 // pred_region
        %p564 = scmp.lt.s32.totalorder %s23, 1
        %s565 = scalar_select %p564, %s23, 1
        %s566 = smul.addr %s565, 4
        %s567 = scalar_lea.vmem %s5, %s566
      $region72: #{dc_and_ce_loss.1} parent=55 // pred_fallthru
        _
    $region56: #{dc_and_ce_loss.1} parent=5 // pred_fallthru
      _
  $region6: #{dc_and_ce_loss.1} parent=0 // loop_footer
    %s16 = sadd.s32 1, %s12
  $region7: #{dc_and_ce_loss.1} parent=0 // loop_footer_branch
    %11 = sbr.rel target = $region3
  $region8: #{dc_and_ce_loss.1} parent=0 // loop_exit
    _

</llo_original>
